<compile_context>
chip_gen: v7x
topology: tpu7x:2x2x1
jax: 0.10.0
libtpu: 0.0.40
codegen_flags: <defaults>
</compile_context>

<pallas_src>
import jax
import jax.numpy as jnp
from jax import lax
from jax.experimental import pallas as pl
from jax.experimental.pallas import tpu as pltpu


def _choose_tile_h(H, C, W, itemsize):
    """Rows per spatial tile: ~1 MiB per streamed block, sublane-aligned."""
    sub = {1: 32, 2: 16, 4: 8}.get(int(itemsize), 8)   # packed-tile minimum per dtype
    budget = 1 << 20                                   # ~1 MiB per streamed input block
    cap = budget // max(1, C * W * int(itemsize))
    cap = max(sub, (cap // sub) * sub)
    if H <= cap:
        return H            # full extent on H (always a legal block dim)
    return cap


def l2_loss_forward(outputs, target, tile_h=None):
    """Pallas implementation of L2Loss.forward(outputs, target) -> [L2, EPE]."""
    assert outputs.shape == target.shape
    B, C, H, W = outputs.shape
    itemsize = jnp.dtype(outputs.dtype).itemsize

    if tile_h is None:
        tile_h = _choose_tile_h(H, C, W, itemsize)
    tile_h = min(tile_h, H)

    num_t = pl.cdiv(H, tile_h)              # total H tiles
    n_half = 2 if num_t >= 2 else 1         # leading parallel axis (v7x megacore @ B==1)
    t_half = pl.cdiv(num_t, n_half)         # H tiles per half
    # Row masking needed iff the last tile is ragged or one half has a padded step.
    needs_mask = (n_half * t_half != num_t) or (num_t * tile_h != H)
    last_b = B - 1

    def tile_idx(h, t):                     # clamped global H-tile index (for the DMA)
        return jnp.minimum(h * t_half + t, num_t - 1)

    in_blk = (1, C, tile_h, W)
    in_spec = pl.BlockSpec(in_blk, lambda h, t, b: (b, 0, tile_idx(h, t), 0))
    # outputs[-1]: batch block pinned to the last element.  With b innermost the
    # block index is unchanged between consecutive grid steps, so the pipeliner
    # skips the repeat copy -> this stream is read ~once instead of B times.
    last_spec = pl.BlockSpec(in_blk, lambda h, t, b: (last_b, 0, tile_idx(h, t), 0))
    out_spec = pl.BlockSpec((1, 1, 1, W), lambda h, t, b: (h, b, 0, 0))

    def kernel(out_ref, last_ref, tgt_ref, l2_ref, epe_ref, l2_acc, epe_acc):
        h = pl.program_id(0)
        t = pl.program_id(1)
        b = pl.program_id(2)

        # Channel reduction as an unrolled elementwise VPU sum (C small & static).
        # Inputs may be bf16 etc.; accumulate in f32 (required on v5e anyway).
        ss_l2 = None
        ss_epe = None
        for c in range(C):
            o_c = out_ref[0, c].astype(jnp.float32)     # (tile_h, W)
            t_c = tgt_ref[0, c].astype(jnp.float32)
            l_c = last_ref[0, c].astype(jnp.float32)
            d_epe = t_c - o_c                           # EPE: target - outputs[b]
            d_l2 = l_c - t_c                            # L2 : outputs[-1] - target[b]
            ss_epe = d_epe * d_epe if ss_epe is None else ss_epe + d_epe * d_epe
            ss_l2 = d_l2 * d_l2 if ss_l2 is None else ss_l2 + d_l2 * d_l2

        if needs_mask:
            # Zero rows outside the real image (ragged last H tile and the clamped
            # overflow step of the second half).  A couple of VPU selects per step.
            g = h * t_half + t                          # unclamped tile index
            row = g * tile_h + lax.broadcasted_iota(jnp.int32, (tile_h, W), 0)
            valid = row < H
            ss_l2 = jnp.where(valid, ss_l2, 0.0)
            ss_epe = jnp.where(valid, ss_epe, 0.0)

        # Per-step sublane reduce (XLU, idle slot) of the per-pixel norms -> (1, W).
        row_l2 = jnp.sum(jnp.sqrt(ss_l2), axis=0, keepdims=True)
        row_epe = jnp.sum(jnp.sqrt(ss_epe), axis=0, keepdims=True)

        @pl.when(t == 0)
        def _():
            l2_acc[b] = jnp.zeros((1, W), jnp.float32)
            epe_acc[b] = jnp.zeros((1, W), jnp.float32)

        l2_acc[b] = l2_acc[b] + row_l2
        epe_acc[b] = epe_acc[b] + row_epe

        # Running per-(half, batch) partial sums; the write at the last h-tile is
        # the one that lands last in HBM (tiny per-step writeback, negligible).
        l2_ref[...] = l2_acc[b].reshape(1, 1, 1, W)
        epe_ref[...] = epe_acc[b].reshape(1, 1, 1, W)

    l2_part, epe_part = pl.pallas_call(
        kernel,
        out_shape=(
            jax.ShapeDtypeStruct((n_half, B, 1, W), jnp.float32),
            jax.ShapeDtypeStruct((n_half, B, 1, W), jnp.float32),
        ),
        grid_spec=pltpu.PrefetchScalarGridSpec(
            num_scalar_prefetch=0,
            grid=(n_half, t_half, B),
            in_specs=[in_spec, last_spec, in_spec],
            out_specs=[out_spec, out_spec],
            scratch_shapes=[
                pltpu.VMEM((B, 1, W), jnp.float32),
                pltpu.VMEM((B, 1, W), jnp.float32),
            ],
        ),
        compiler_params=pltpu.CompilerParams(
            # Leading half-split axis is parallel (both v7x TensorCores get work
            # even at B == 1).  The h-tile and batch axes stay "arbitrary": the
            # scratch accumulator + last-image DMA reuse rely on their order.
            dimension_semantics=("parallel", "arbitrary", "arbitrary"),
            vmem_limit_bytes=32 * 1024 * 1024,
        ),
    )(outputs, outputs, target)

    denom = jnp.float32(B * H * W)                      # mean over (B, H, W)
    lossvalue = (jnp.sum(l2_part) / denom).astype(jnp.float32)
    epevalue = (jnp.sum(epe_part) / denom).astype(jnp.float32)
    return [lossvalue, epevalue]


def _reference(outputs, target):
    # Pure-JAX reference mirroring the PyTorch semantics.
    l2 = jnp.sqrt(jnp.sum((outputs[-1] - target) ** 2, axis=1)).mean()
    epe = jnp.sqrt(jnp.sum((target - outputs) ** 2, axis=1)).mean()
    return l2, epe


if __name__ == "__main__":
    key = jax.random.PRNGKey(0)
    k1, k2, k3, k4 = jax.random.split(key, 4)

    # Case 1: small flow-like inputs (NCHW), single-tile / no-mask path.
    B, C, H, W = 2, 2, 16, 16
    outputs = jax.random.normal(k1, (B, C, H, W), dtype=jnp.float32)
    target = jax.random.normal(k2, (B, C, H, W), dtype=jnp.float32)
    lossvalue, epevalue = l2_loss_forward(outputs, target)
    jax.block_until_ready(lossvalue)
    jax.block_until_ready(epevalue)
    ref_l2, ref_epe = _reference(outputs, target)
    assert jnp.allclose(lossvalue, ref_l2, rtol=1e-5, atol=1e-5), (lossvalue, ref_l2)
    assert jnp.allclose(epevalue, ref_epe, rtol=1e-5, atol=1e-5), (epevalue, ref_epe)

    # Case 2: ragged H with a forced small tile exercises the half-split grid,
    # index clamping and the in-kernel tail-masking path.
    B2, C2, H2, W2 = 3, 2, 20, 16
    outputs2 = jax.random.normal(k3, (B2, C2, H2, W2), dtype=jnp.float32)
    target2 = jax.random.normal(k4, (B2, C2, H2, W2), dtype=jnp.float32)
    loss2, epe2 = l2_loss_forward(outputs2, target2, tile_h=8)
    jax.block_until_ready(loss2)
    jax.block_until_ready(epe2)
    ref2_l2, ref2_epe = _reference(outputs2, target2)
    assert jnp.allclose(loss2, ref2_l2, rtol=1e-5, atol=1e-5), (loss2, ref2_l2)
    assert jnp.allclose(epe2, ref2_epe, rtol=1e-5, atol=1e-5), (epe2, ref2_epe)

    print("KERNEL_OK")
</pallas_src>

<mosaic_0001>
module attributes {stable_mosaic.version = 11 : i64} {
  func.func @kernel(%arg0: i32, %arg1: i32, %arg2: i32, %arg3: memref<1x2x16x16xf32, #tpu.memory_space<vmem>>, %arg4: memref<1x2x16x16xf32, #tpu.memory_space<vmem>>, %arg5: memref<1x2x16x16xf32, #tpu.memory_space<vmem>>, %arg6: memref<1x1x1x16xf32, #tpu.memory_space<vmem>>, %arg7: memref<1x1x1x16xf32, #tpu.memory_space<vmem>>, %arg8: memref<2x1x16xf32, #tpu.memory_space<vmem>>, %arg9: memref<2x1x16xf32, #tpu.memory_space<vmem>>) attributes {dimension_semantics = [#tpu.dimension_semantics<parallel>, #tpu.dimension_semantics<arbitrary>, #tpu.dimension_semantics<arbitrary>], iteration_bounds = array<i64: 1, 1, 2>, scalar_prefetch = 0 : i64, scratch_operands = 2 : i64, tpu.core_type = #tpu.core_type<tc>, window_params = [{transform_indices = @transform_0, window_bounds = array<i64: 1, 2, 16, 16>}, {transform_indices = @transform_1, window_bounds = array<i64: 1, 2, 16, 16>}, {transform_indices = @transform_2, window_bounds = array<i64: 1, 2, 16, 16>}, {transform_indices = @transform_3, window_bounds = array<i64: 1, 1, 1, 16>}, {transform_indices = @transform_4, window_bounds = array<i64: 1, 1, 1, 16>}]} {
    %c0 = arith.constant 0 : index
    %c0_0 = arith.constant 0 : index
    %c0_1 = arith.constant 0 : index
    %c0_2 = arith.constant 0 : index
    %0 = vector.load %arg3[%c0, %c0_0, %c0_1, %c0_2] : memref<1x2x16x16xf32, #tpu.memory_space<vmem>>, vector<1x1x16x16xf32>
    %1 = vector.shape_cast %0 : vector<1x1x16x16xf32> to vector<16x16xf32>
    %c0_3 = arith.constant 0 : index
    %c0_4 = arith.constant 0 : index
    %c0_5 = arith.constant 0 : index
    %c0_6 = arith.constant 0 : index
    %2 = vector.load %arg5[%c0_3, %c0_4, %c0_5, %c0_6] : memref<1x2x16x16xf32, #tpu.memory_space<vmem>>, vector<1x1x16x16xf32>
    %3 = vector.shape_cast %2 : vector<1x1x16x16xf32> to vector<16x16xf32>
    %c0_7 = arith.constant 0 : index
    %c0_8 = arith.constant 0 : index
    %c0_9 = arith.constant 0 : index
    %c0_10 = arith.constant 0 : index
    %4 = vector.load %arg4[%c0_7, %c0_8, %c0_9, %c0_10] : memref<1x2x16x16xf32, #tpu.memory_space<vmem>>, vector<1x1x16x16xf32>
    %5 = vector.shape_cast %4 : vector<1x1x16x16xf32> to vector<16x16xf32>
    %6 = arith.subf %3, %1 : vector<16x16xf32>
    %7 = arith.subf %5, %3 : vector<16x16xf32>
    %8 = arith.mulf %6, %6 : vector<16x16xf32>
    %9 = arith.mulf %7, %7 : vector<16x16xf32>
    %c0_11 = arith.constant 0 : index
    %c1 = arith.constant 1 : index
    %c0_12 = arith.constant 0 : index
    %c0_13 = arith.constant 0 : index
    %10 = vector.load %arg3[%c0_11, %c1, %c0_12, %c0_13] : memref<1x2x16x16xf32, #tpu.memory_space<vmem>>, vector<1x1x16x16xf32>
    %11 = vector.shape_cast %10 : vector<1x1x16x16xf32> to vector<16x16xf32>
    %c0_14 = arith.constant 0 : index
    %c1_15 = arith.constant 1 : index
    %c0_16 = arith.constant 0 : index
    %c0_17 = arith.constant 0 : index
    %12 = vector.load %arg5[%c0_14, %c1_15, %c0_16, %c0_17] : memref<1x2x16x16xf32, #tpu.memory_space<vmem>>, vector<1x1x16x16xf32>
    %13 = vector.shape_cast %12 : vector<1x1x16x16xf32> to vector<16x16xf32>
    %c0_18 = arith.constant 0 : index
    %c1_19 = arith.constant 1 : index
    %c0_20 = arith.constant 0 : index
    %c0_21 = arith.constant 0 : index
    %14 = vector.load %arg4[%c0_18, %c1_19, %c0_20, %c0_21] : memref<1x2x16x16xf32, #tpu.memory_space<vmem>>, vector<1x1x16x16xf32>
    %15 = vector.shape_cast %14 : vector<1x1x16x16xf32> to vector<16x16xf32>
    %16 = arith.subf %13, %11 : vector<16x16xf32>
    %17 = arith.subf %15, %13 : vector<16x16xf32>
    %18 = arith.mulf %16, %16 : vector<16x16xf32>
    %19 = arith.addf %8, %18 : vector<16x16xf32>
    %20 = arith.mulf %17, %17 : vector<16x16xf32>
    %21 = arith.addf %9, %20 : vector<16x16xf32>
    %22 = math.sqrt %21 : vector<16x16xf32>
    %cst = arith.constant dense<0.000000e+00> : vector<16xf32>
    %23 = vector.multi_reduction <add>, %22, %cst [0] : vector<16x16xf32> to vector<16xf32>
    %24 = vector.shape_cast %23 : vector<16xf32> to vector<1x16xf32>
    %25 = math.sqrt %19 : vector<16x16xf32>
    %cst_22 = arith.constant dense<0.000000e+00> : vector<16xf32>
    %26 = vector.multi_reduction <add>, %25, %cst_22 [0] : vector<16x16xf32> to vector<16xf32>
    %27 = vector.shape_cast %26 : vector<16xf32> to vector<1x16xf32>
    %c0_i32 = arith.constant 0 : i32
    %28 = arith.cmpi eq, %arg1, %c0_i32 : i32
    %29 = arith.extui %28 : i1 to i32
    %c0_i32_23 = arith.constant 0 : i32
    %30 = arith.cmpi ne, %29, %c0_i32_23 : i32
    scf.if %30 {
      %cst_44 = arith.constant 0.000000e+00 : f32
      %57 = vector.broadcast %cst_44 : f32 to vector<1x16xf32>
      %58 = arith.index_cast %arg2 : i32 to index
      %c0_45 = arith.constant 0 : index
      %c0_46 = arith.constant 0 : index
      %59 = vector.load %arg8[%58, %c0_45, %c0_46] : memref<2x1x16xf32, #tpu.memory_space<vmem>>, vector<1x1x16xf32>
      %60 = vector.shape_cast %59 : vector<1x1x16xf32> to vector<1x16xf32>
      %61 = vector.shape_cast %57 : vector<1x16xf32> to vector<1x1x16xf32>
      tpu.vector_store %arg8[%58, %c0_45, %c0_46], %61 {strides = array<i32>} : memref<2x1x16xf32, #tpu.memory_space<vmem>>, vector<1x1x16xf32>,
      %cst_47 = arith.constant 0.000000e+00 : f32
      %62 = vector.broadcast %cst_47 : f32 to vector<1x16xf32>
      %63 = arith.index_cast %arg2 : i32 to index
      %c0_48 = arith.constant 0 : index
      %c0_49 = arith.constant 0 : index
      %64 = vector.load %arg9[%63, %c0_48, %c0_49] : memref<2x1x16xf32, #tpu.memory_space<vmem>>, vector<1x1x16xf32>
      %65 = vector.shape_cast %64 : vector<1x1x16xf32> to vector<1x16xf32>
      %66 = vector.shape_cast %62 : vector<1x16xf32> to vector<1x1x16xf32>
      tpu.vector_store %arg9[%63, %c0_48, %c0_49], %66 {strides = array<i32>} : memref<2x1x16xf32, #tpu.memory_space<vmem>>, vector<1x1x16xf32>,
    } else {
    }
    %31 = arith.index_cast %arg2 : i32 to index
    %c0_24 = arith.constant 0 : index
    %c0_25 = arith.constant 0 : index
    %32 = vector.load %arg8[%31, %c0_24, %c0_25] : memref<2x1x16xf32, #tpu.memory_space<vmem>>, vector<1x1x16xf32>
    %33 = vector.shape_cast %32 : vector<1x1x16xf32> to vector<1x16xf32>
    %34 = arith.addf %33, %24 : vector<1x16xf32>
    %35 = arith.index_cast %arg2 : i32 to index
    %c0_26 = arith.constant 0 : index
    %c0_27 = arith.constant 0 : index
    %36 = vector.load %arg8[%35, %c0_26, %c0_27] : memref<2x1x16xf32, #tpu.memory_space<vmem>>, vector<1x1x16xf32>
    %37 = vector.shape_cast %36 : vector<1x1x16xf32> to vector<1x16xf32>
    %38 = vector.shape_cast %34 : vector<1x16xf32> to vector<1x1x16xf32>
    tpu.vector_store %arg8[%35, %c0_26, %c0_27], %38 {strides = array<i32>} : memref<2x1x16xf32, #tpu.memory_space<vmem>>, vector<1x1x16xf32>,
    %39 = arith.index_cast %arg2 : i32 to index
    %c0_28 = arith.constant 0 : index
    %c0_29 = arith.constant 0 : index
    %40 = vector.load %arg9[%39, %c0_28, %c0_29] : memref<2x1x16xf32, #tpu.memory_space<vmem>>, vector<1x1x16xf32>
    %41 = vector.shape_cast %40 : vector<1x1x16xf32> to vector<1x16xf32>
    %42 = arith.addf %41, %27 : vector<1x16xf32>
    %43 = arith.index_cast %arg2 : i32 to index
    %c0_30 = arith.constant 0 : index
    %c0_31 = arith.constant 0 : index
    %44 = vector.load %arg9[%43, %c0_30, %c0_31] : memref<2x1x16xf32, #tpu.memory_space<vmem>>, vector<1x1x16xf32>
    %45 = vector.shape_cast %44 : vector<1x1x16xf32> to vector<1x16xf32>
    %46 = vector.shape_cast %42 : vector<1x16xf32> to vector<1x1x16xf32>
    tpu.vector_store %arg9[%43, %c0_30, %c0_31], %46 {strides = array<i32>} : memref<2x1x16xf32, #tpu.memory_space<vmem>>, vector<1x1x16xf32>,
    %47 = arith.index_cast %arg2 : i32 to index
    %c0_32 = arith.constant 0 : index
    %c0_33 = arith.constant 0 : index
    %48 = vector.load %arg8[%47, %c0_32, %c0_33] : memref<2x1x16xf32, #tpu.memory_space<vmem>>, vector<1x1x16xf32>
    %49 = vector.shape_cast %48 : vector<1x1x16xf32> to vector<1x16xf32>
    %50 = vector.shape_cast %49 : vector<1x16xf32> to vector<1x1x1x16xf32>
    %c0_34 = arith.constant 0 : index
    %c0_35 = arith.constant 0 : index
    %c0_36 = arith.constant 0 : index
    %c0_37 = arith.constant 0 : index
    %51 = vector.load %arg6[%c0_34, %c0_35, %c0_36, %c0_37] : memref<1x1x1x16xf32, #tpu.memory_space<vmem>>, vector<1x1x1x16xf32>
    tpu.vector_store %arg6[%c0_34, %c0_35, %c0_36, %c0_37], %50 {strides = array<i32>} : memref<1x1x1x16xf32, #tpu.memory_space<vmem>>, vector<1x1x1x16xf32>,
    %52 = arith.index_cast %arg2 : i32 to index
    %c0_38 = arith.constant 0 : index
    %c0_39 = arith.constant 0 : index
    %53 = vector.load %arg9[%52, %c0_38, %c0_39] : memref<2x1x16xf32, #tpu.memory_space<vmem>>, vector<1x1x16xf32>
    %54 = vector.shape_cast %53 : vector<1x1x16xf32> to vector<1x16xf32>
    %55 = vector.shape_cast %54 : vector<1x16xf32> to vector<1x1x1x16xf32>
    %c0_40 = arith.constant 0 : index
    %c0_41 = arith.constant 0 : index
    %c0_42 = arith.constant 0 : index
    %c0_43 = arith.constant 0 : index
    %56 = vector.load %arg7[%c0_40, %c0_41, %c0_42, %c0_43] : memref<1x1x1x16xf32, #tpu.memory_space<vmem>>, vector<1x1x1x16xf32>
    tpu.vector_store %arg7[%c0_40, %c0_41, %c0_42, %c0_43], %55 {strides = array<i32>} : memref<1x1x1x16xf32, #tpu.memory_space<vmem>>, vector<1x1x1x16xf32>,
    return
  }
  func.func @transform_0(%arg0: i32, %arg1: i32, %arg2: i32) -> (i32, i32, i32, i32) {
    %c1_i32 = arith.constant 1 : i32
    %0 = arith.muli %arg0, %c1_i32 : i32
    %1 = arith.addi %0, %arg1 : i32
    %c0_i32 = arith.constant 0 : i32
    %2 = arith.minsi %1, %c0_i32 : i32
    %c0_i32_0 = arith.constant 0 : i32
    %c0_i32_1 = arith.constant 0 : i32
    %c0_i32_2 = arith.constant 0 : i32
    return %arg2, %c0_i32_0, %2, %c0_i32_1 : i32, i32, i32, i32
  }
  func.func @transform_1(%arg0: i32, %arg1: i32, %arg2: i32) -> (i32, i32, i32, i32) {
    %c1_i32 = arith.constant 1 : i32
    %0 = arith.muli %arg0, %c1_i32 : i32
    %1 = arith.addi %0, %arg1 : i32
    %c0_i32 = arith.constant 0 : i32
    %2 = arith.minsi %1, %c0_i32 : i32
    %c1_i32_0 = arith.constant 1 : i32
    %c0_i32_1 = arith.constant 0 : i32
    %c0_i32_2 = arith.constant 0 : i32
    %c0_i32_3 = arith.constant 0 : i32
    return %c1_i32_0, %c0_i32_1, %2, %c0_i32_2 : i32, i32, i32, i32
  }
  func.func @transform_2(%arg0: i32, %arg1: i32, %arg2: i32) -> (i32, i32, i32, i32) {
    %c1_i32 = arith.constant 1 : i32
    %0 = arith.muli %arg0, %c1_i32 : i32
    %1 = arith.addi %0, %arg1 : i32
    %c0_i32 = arith.constant 0 : i32
    %2 = arith.minsi %1, %c0_i32 : i32
    %c0_i32_0 = arith.constant 0 : i32
    %c0_i32_1 = arith.constant 0 : i32
    %c0_i32_2 = arith.constant 0 : i32
    return %arg2, %c0_i32_0, %2, %c0_i32_1 : i32, i32, i32, i32
  }
  func.func @transform_3(%arg0: i32, %arg1: i32, %arg2: i32) -> (i32, i32, i32, i32) {
    %c0_i32 = arith.constant 0 : i32
    %c0_i32_0 = arith.constant 0 : i32
    %c0_i32_1 = arith.constant 0 : i32
    return %arg0, %arg2, %c0_i32, %c0_i32_0 : i32, i32, i32, i32
  }
  func.func @transform_4(%arg0: i32, %arg1: i32, %arg2: i32) -> (i32, i32, i32, i32) {
    %c0_i32 = arith.constant 0 : i32
    %c0_i32_0 = arith.constant 0 : i32
    %c0_i32_1 = arith.constant 0 : i32
    return %arg0, %arg2, %c0_i32, %c0_i32_0 : i32, i32, i32, i32
  }
}

</mosaic_0001>

<llo_original>
// kernel: tpu_custom_call.1
$region0: #{tpu_custom_call.1}
  #allocation0 [shape = 'u32[]', space=smem, size = 0x4, offset = 0x4, fixed_abs, tag = 'smem constant byte address 0x4 - core index']
  #allocation1 [shape = 'u32[144,128]{1,0:T(1,128)}', space=vmem, size = 0x12000, scoped, tag = 'internal scratch']
  #allocation2 [shape = 'f32[2,1,16]{2,1,0:T(1,128)}', space=vmem, size = 0x400, scoped, tag = 'scratch operand']
  #allocation3 [shape = 'f32[2,1,16]{2,1,0:T(1,128)}', space=vmem, size = 0x400, scoped, tag = 'scratch operand']
  %s0 = inlined_call_operand.hbm [shape: f32[2,2,16,16], index: 0, kind: input, shape index: {}]
  %s1 = inlined_call_operand.hbm [shape: f32[2,2,16,16], index: 1, kind: input, shape index: {}]
  %s2 = inlined_call_operand.hbm [shape: f32[2,2,16,16], index: 2, kind: input, shape index: {}]
  %s3 = inlined_call_operand.hbm [shape: f32[1,2,1,16], index: 3, kind: output, shape index: {0}]
  %s4 = inlined_call_operand.hbm [shape: f32[1,2,1,16], index: 4, kind: output, shape index: {1}]
  %5 = xla_tuple %s3, %s4
  %s6 = sld [smem:[#allocation0]]
  $region69: #{tpu_custom_call.1} parent=0
    _
  %s8 = ssub.s32 1, %s6
  %s9 = scalar_select 0, %s8, %s6
  $region1: #{tpu_custom_call.1} parent=0
    #allocation4 [shape = 'u8[32768]{0}', space=vmem, size = 0x8000, scoped, tag = 'input window, operand 0']
    #allocation5 [shape = 's32[2]{0}', space=sflag, size = 0x8, scoped, tag = 'scoped memory for tpu_custom_call.1']
    #allocation6 [shape = 's32[2]{0}', space=sflag, size = 0x8, scoped, tag = 'scoped memory for tpu_custom_call.1']
    #allocation7 [shape = 'u8[16384]{0}', space=vmem, size = 0x4000, scoped, tag = 'input window, operand 1, single buffered']
    #allocation8 [shape = 's32[1]{0}', space=sflag, size = 0x4, scoped, tag = 'scoped memory for tpu_custom_call.1']
    #allocation9 [shape = 'u8[32768]{0}', space=vmem, size = 0x8000, scoped, tag = 'input window, operand 2']
    #allocation10 [shape = 'u8[1024]{0}', space=vmem, size = 0x400, scoped, tag = 'output window, operand 0']
    #allocation11 [shape = 'u8[1024]{0}', space=vmem, size = 0x400, scoped, tag = 'output window, operand 1']
    #allocation12 [shape = 's32[2]{0}', space=sflag, size = 0x8, scoped, tag = 'scoped memory for tpu_custom_call.1']
    %10 = vsyncpa [#allocation5], 0
    %s11 = scalar_lea.sflag [#allocation5], 1
    %12 = vsyncpa %s11, 0
    %13 = vsyncpa [#allocation8], 0
    %14 = vsyncpa [#allocation6], 0
    %s15 = scalar_lea.sflag [#allocation6], 1
    %16 = vsyncpa %s15, 0
    %17 = vsyncpa [#allocation12], 0
    %s18 = scalar_lea.sflag [#allocation12], 1
    %19 = vsyncpa %s18, 0
    loop: start=0, step=1, limit=4
    $region2: #{tpu_custom_call.1} parent=1 // loop_pre_header
      _
    $region3: #{tpu_custom_call.1} parent=1 // loop_header
      %s21 = sphi 0, %s25
      %p22 = scmp.ge.s32.totalorder %s21, 4
      %s28 = sphi 0, %s47
      %s29 = sphi 0, %s43
      %s30 = sphi 0, %s39
      %s31 = sphi 0, %s28
      %s32 = sphi 0, %s29
      %s33 = sphi 0, %s30
      %s34 = sphi 0, %s31
      %s35 = sphi 0, %s32
      %s36 = sphi 0, %s33
      %s58 = sphi 0, %s60
      %s61 = sphi 0, %s58
      %s62 = sphi 0, %s61
      %s78 = sphi 0, %s62
      %s90 = sphi 0, %s92
      %s93 = sphi 0, %s90
      %s94 = sphi 0, %s93
      %s110 = sphi 0, %s94
      %s124 = sphi 0, %s126
      %s127 = sphi 0, %s124
      %s128 = sphi 0, %s127
      %s144 = sphi 0, %s128
      %s152 = sphi 0, %s154
      %s155 = sphi 0, %s152
      %s156 = sphi 0, %s155
      %s172 = sphi 0, %s156
      %s180 = sphi 0, %s182
      %s183 = sphi 0, %s180
      %s184 = sphi 0, %s183
      %s200 = sphi 0, %s184
    $region4: #{tpu_custom_call.1} parent=1 // loop_header_branch
      %24 = sbr.rel (%p22) target = $region8
    $region5: #{tpu_custom_call.1} parent=1 // loop_body
      %s26 = ssub.s32 %s21, 1
      %s27 = ssub.s32 %s21, 2
      %s37 = sadd.s32 1, %s30
      %p38 = scmp.ge.s32.totalorder %s37, 2
      %s39 = scalar_select %p38, 0, %s37
      %s40 = sadd.s32 1, %s29
      %s41 = scalar_select %p38, %s40, %s29
      %p42 = scmp.ge.s32.totalorder %s41, 1
      %s43 = scalar_select %p42, 0, %s41
      %s44 = sadd.s32 1, %s28
      %s45 = scalar_select %p42, %s44, %s28
      %p46 = scmp.ge.s32.totalorder %s45, 1
      %s47 = scalar_select %p46, 0, %s45
      %s48 = sadd.s32 %s28, %s29
      %p49 = scmp.lt.s32.totalorder %s48, 0
      %s50 = scalar_select %p49, %s48, 0
      %s51 = sadd.s32 %s47, %s43
      %p52 = scmp.lt.s32.totalorder %s51, 0
      %s53 = scalar_select %p52, %s51, 0
      %s54 = ssub.s32 %s30, %s39
      %s55 = ssub.s32 %s50, %s53
      %s56 = sor.u32 %s54, %s55
      %p57 = scmp.eq.s32.totalorder %s56, 0
      %s59 = sadd.s32 %s58, 1
      %s60 = scalar_select %p57, %s58, %s59
      %p63 = pneg %p57
      %p64 = scmp.eq.s32.totalorder %s21, 1
      %p65 = por %p63, %p64
      %p66 = scmp.ne.s32.totalorder %s58, %s61
      %p67 = scmp.eq.s32.totalorder %s21, 0
      %p68 = por %p66, %p67
      %p69 = scmp.ne.s32.totalorder %s58, %s61
      %p70 = scmp.eq.s32.totalorder %s26, 1
      %p71 = por %p69, %p70
      %p72 = scmp.ne.s32.totalorder %s61, %s62
      %p73 = scmp.eq.s32.totalorder %s26, 0
      %p74 = por %p72, %p73
      %p75 = scmp.ne.s32.totalorder %s61, %s62
      %p76 = scmp.eq.s32.totalorder %s27, 1
      %p77 = por %p75, %p76
      %p79 = scmp.ne.s32.totalorder %s62, %s78
      %p80 = scmp.eq.s32.totalorder %s27, 0
      %p81 = por %p79, %p80
      %s82 = sadd.s32 %s28, %s29
      %p83 = scmp.lt.s32.totalorder %s82, 0
      %s84 = scalar_select %p83, %s82, 0
      %s85 = sadd.s32 %s47, %s43
      %p86 = scmp.lt.s32.totalorder %s85, 0
      %s87 = scalar_select %p86, %s85, 0
      %s88 = ssub.s32 %s84, %s87
      %p89 = scmp.eq.s32.totalorder %s88, 0
      %s91 = sadd.s32 %s90, 1
      %s92 = scalar_select %p89, %s90, %s91
      %p95 = pneg %p89
      %p96 = scmp.eq.s32.totalorder %s21, 1
      %p97 = por %p95, %p96
      %p98 = scmp.ne.s32.totalorder %s90, %s93
      %p99 = scmp.eq.s32.totalorder %s21, 0
      %p100 = por %p98, %p99
      %p101 = scmp.ne.s32.totalorder %s90, %s93
      %p102 = scmp.eq.s32.totalorder %s26, 1
      %p103 = por %p101, %p102
      %p104 = scmp.ne.s32.totalorder %s93, %s94
      %p105 = scmp.eq.s32.totalorder %s26, 0
      %p106 = por %p104, %p105
      %p107 = scmp.ne.s32.totalorder %s93, %s94
      %p108 = scmp.eq.s32.totalorder %s27, 1
      %p109 = por %p107, %p108
      %p111 = scmp.ne.s32.totalorder %s94, %s110
      %p112 = scmp.eq.s32.totalorder %s27, 0
      %p113 = por %p111, %p112
      %s114 = sadd.s32 %s28, %s29
      %p115 = scmp.lt.s32.totalorder %s114, 0
      %s116 = scalar_select %p115, %s114, 0
      %s117 = sadd.s32 %s47, %s43
      %p118 = scmp.lt.s32.totalorder %s117, 0
      %s119 = scalar_select %p118, %s117, 0
      %s120 = ssub.s32 %s30, %s39
      %s121 = ssub.s32 %s116, %s119
      %s122 = sor.u32 %s120, %s121
      %p123 = scmp.eq.s32.totalorder %s122, 0
      %s125 = sadd.s32 %s124, 1
      %s126 = scalar_select %p123, %s124, %s125
      %p129 = pneg %p123
      %p130 = scmp.eq.s32.totalorder %s21, 1
      %p131 = por %p129, %p130
      %p132 = scmp.ne.s32.totalorder %s124, %s127
      %p133 = scmp.eq.s32.totalorder %s21, 0
      %p134 = por %p132, %p133
      %p135 = scmp.ne.s32.totalorder %s124, %s127
      %p136 = scmp.eq.s32.totalorder %s26, 1
      %p137 = por %p135, %p136
      %p138 = scmp.ne.s32.totalorder %s127, %s128
      %p139 = scmp.eq.s32.totalorder %s26, 0
      %p140 = por %p138, %p139
      %p141 = scmp.ne.s32.totalorder %s127, %s128
      %p142 = scmp.eq.s32.totalorder %s27, 1
      %p143 = por %p141, %p142
      %p145 = scmp.ne.s32.totalorder %s128, %s144
      %p146 = scmp.eq.s32.totalorder %s27, 0
      %p147 = por %p145, %p146
      %s148 = ssub.s32 %s28, %s47
      %s149 = ssub.s32 %s30, %s39
      %s150 = sor.u32 %s148, %s149
      %p151 = scmp.eq.s32.totalorder %s150, 0
      %s153 = sadd.s32 %s152, 1
      %s154 = scalar_select %p151, %s152, %s153
      %p157 = pneg %p151
      %p158 = scmp.eq.s32.totalorder %s21, 1
      %p159 = por %p157, %p158
      %p160 = scmp.ne.s32.totalorder %s152, %s155
      %p161 = scmp.eq.s32.totalorder %s21, 0
      %p162 = por %p160, %p161
      %p163 = scmp.ne.s32.totalorder %s152, %s155
      %p164 = scmp.eq.s32.totalorder %s26, 1
      %p165 = por %p163, %p164
      %p166 = scmp.ne.s32.totalorder %s155, %s156
      %p167 = scmp.eq.s32.totalorder %s26, 0
      %p168 = por %p166, %p167
      %p169 = scmp.ne.s32.totalorder %s155, %s156
      %p170 = scmp.eq.s32.totalorder %s27, 1
      %p171 = por %p169, %p170
      %p173 = scmp.ne.s32.totalorder %s156, %s172
      %p174 = scmp.eq.s32.totalorder %s27, 0
      %p175 = por %p173, %p174
      %s176 = ssub.s32 %s28, %s47
      %s177 = ssub.s32 %s30, %s39
      %s178 = sor.u32 %s176, %s177
      %p179 = scmp.eq.s32.totalorder %s178, 0
      %s181 = sadd.s32 %s180, 1
      %s182 = scalar_select %p179, %s180, %s181
      %p185 = pneg %p179
      %p186 = scmp.eq.s32.totalorder %s21, 1
      %p187 = por %p185, %p186
      %p188 = scmp.ne.s32.totalorder %s180, %s183
      %p189 = scmp.eq.s32.totalorder %s21, 0
      %p190 = por %p188, %p189
      %p191 = scmp.ne.s32.totalorder %s180, %s183
      %p192 = scmp.eq.s32.totalorder %s26, 1
      %p193 = por %p191, %p192
      %p194 = scmp.ne.s32.totalorder %s183, %s184
      %p195 = scmp.eq.s32.totalorder %s26, 0
      %p196 = por %p194, %p195
      %p197 = scmp.ne.s32.totalorder %s183, %s184
      %p198 = scmp.eq.s32.totalorder %s27, 1
      %p199 = por %p197, %p198
      %p201 = scmp.ne.s32.totalorder %s184, %s200
      %p202 = scmp.eq.s32.totalorder %s27, 0
      %p203 = por %p201, %p202
      %p204 = scmp.le.s32.totalorder 1, %s21
      %p205 = scmp.lt.s32.totalorder %s21, 3
      %p206 = pnand %p204, %p205
      %p207 = pneg %p206
      // Predicated region
      $region9: #{tpu_custom_call.1} parent=5 // pred_check
        _
      $region10: #{tpu_custom_call.1} parent=5 // pred_check_branch
        %209 = sbr.rel (%p206) target = $region12
      $region11: #{tpu_custom_call.1} parent=5 // pred_region
        %s210 = ssub.s32 %s21, 1
        // Predicated region
        $region13: #{tpu_custom_call.1} parent=11 // pred_check
          %p211 = pneg %p106
        $region14: #{tpu_custom_call.1} parent=11 // pred_check_branch
          %213 = sbr.rel (%p211) target = $region16
        $region15: #{tpu_custom_call.1} parent=11 // pred_region
          %s214 = sadd.s32 %s31, %s32
          %p215 = scmp.lt.s32.totalorder %s214, 0
          %s216 = scalar_select %p215, %s214, 0
          %s217 = smul.u32 2, %s216
          %s219 = ssub.s32 512, 512
          %220 = vsyncadd [#allocation8], %s219
          %s221 = sadd.s32 %s217, 4
          %s222 = smul.addr %s221, 128
          %s223 = scalar_lea.hbm %s1, %s222
          %s224 = sshll.u32 [#allocation7], 4
          %s225 = int_to_ptr.vmem [resolvable:$true] %s224
          %230 = dma.hbm_to_vmem [thread:$0]  %s223, 512, %s225, [#allocation8], 128, 128, 8
        $region16: #{tpu_custom_call.1} parent=11 // pred_fallthru
          _
      $region12: #{tpu_custom_call.1} parent=5 // pred_fallthru
        _
      %p231 = scmp.lt.s32.totalorder %s21, 2
      // Predicated region
      $region17: #{tpu_custom_call.1} parent=5 // pred_check
        %p232 = pneg %p231
      $region18: #{tpu_custom_call.1} parent=5 // pred_check_branch
        %234 = sbr.rel (%p232) target = $region20
      $region19: #{tpu_custom_call.1} parent=5 // pred_region
        // Predicated region
        $region21: #{tpu_custom_call.1} parent=19 // pred_check
          %p235 = pneg %p68
        $region22: #{tpu_custom_call.1} parent=19 // pred_check_branch
          %237 = sbr.rel (%p235) target = $region24
        $region23: #{tpu_custom_call.1} parent=19 // pred_region
          %s238 = sand.u32 %s21, 1
          %s239 = scalar_lea.sflag [#allocation5], %s238
          %s240 = sand.u32 %s58, 1
          %s241 = smul.addr %s240, 32
          %s242 = scalar_lea.vmem [#allocation4], %s241
          %s243 = sadd.s32 %s28, %s29
          %p244 = scmp.lt.s32.totalorder %s243, 0
          %s245 = scalar_select %p244, %s243, 0
          %s246 = smul.u32 2, %s245
          %s248 = ssub.s32 512, 512
          %249 = vsyncadd %s239, %s248
          %s250 = smul.addr %s30, 4
          %s251 = sadd.s32 %s246, %s250
          %s252 = smul.addr %s251, 128
          %s253 = scalar_lea.hbm %s0, %s252
          %s254 = sshll.u32 %s242, 4
          %s255 = int_to_ptr.vmem [resolvable:$true] %s254
          %260 = dma.hbm_to_vmem [thread:$0]  %s253, 512, %s255, %s239, 128, 128, 8
        $region24: #{tpu_custom_call.1} parent=19 // pred_fallthru
          _
        // Predicated region
        $region25: #{tpu_custom_call.1} parent=19 // pred_check
          %p261 = pneg %p134
        $region26: #{tpu_custom_call.1} parent=19 // pred_check_branch
          %263 = sbr.rel (%p261) target = $region28
        $region27: #{tpu_custom_call.1} parent=19 // pred_region
          %s264 = sand.u32 %s21, 1
          %s265 = scalar_lea.sflag [#allocation5], %s264
          %s266 = sand.u32 %s124, 1
          %s267 = smul.addr %s266, 32
          %s268 = scalar_lea.vmem [#allocation9], %s267
          %s269 = sadd.s32 %s28, %s29
          %p270 = scmp.lt.s32.totalorder %s269, 0
          %s271 = scalar_select %p270, %s269, 0
          %s272 = smul.u32 2, %s271
          %s274 = ssub.s32 512, 512
          %275 = vsyncadd %s265, %s274
          %s276 = smul.addr %s30, 4
          %s277 = sadd.s32 %s272, %s276
          %s278 = smul.addr %s277, 128
          %s279 = scalar_lea.hbm %s2, %s278
          %s280 = sshll.u32 %s268, 4
          %s281 = int_to_ptr.vmem [resolvable:$true] %s280
          %286 = dma.hbm_to_vmem [thread:$0]  %s279, 512, %s281, %s265, 128, 128, 8
        $region28: #{tpu_custom_call.1} parent=19 // pred_fallthru
          _
      $region20: #{tpu_custom_call.1} parent=5 // pred_fallthru
        _
      %p287 = scmp.le.s32.totalorder 1, %s21
      %p288 = scmp.lt.s32.totalorder %s21, 3
      %p289 = pnand %p287, %p288
      %p290 = pneg %p289
      // Predicated region
      $region29: #{tpu_custom_call.1} parent=5 // pred_check
        _
      $region30: #{tpu_custom_call.1} parent=5 // pred_check_branch
        %292 = sbr.rel (%p289) target = $region32
      $region31: #{tpu_custom_call.1} parent=5 // pred_region
        %s293 = ssub.s32 %s21, 1
        %s294 = sand.u32 %s26, 1
        %s295 = scalar_lea.sflag [#allocation5], %s294
        %s296 = sand.u32 %s61, 1
        %s297 = smul.addr %s296, 32
        %s298 = scalar_lea.vmem [#allocation4], %s297
        // Predicated region
        $region33: #{tpu_custom_call.1} parent=31 // pred_check
          %p299 = pneg %p74
        $region34: #{tpu_custom_call.1} parent=31 // pred_check_branch
          %301 = sbr.rel (%p299) target = $region36
        $region35: #{tpu_custom_call.1} parent=31 // pred_region
          %302 = dma.done %s295, 512
        $region36: #{tpu_custom_call.1} parent=31 // pred_fallthru
          _
        // Predicated region
        $region37: #{tpu_custom_call.1} parent=31 // pred_check
          %p303 = pneg %p106
        $region38: #{tpu_custom_call.1} parent=31 // pred_check_branch
          %305 = sbr.rel (%p303) target = $region40
        $region39: #{tpu_custom_call.1} parent=31 // pred_region
          %306 = dma.done [#allocation8], 512
        $region40: #{tpu_custom_call.1} parent=31 // pred_fallthru
          _
        %s307 = sand.u32 %s26, 1
        %s308 = scalar_lea.sflag [#allocation5], %s307
        %s309 = sand.u32 %s127, 1
        %s310 = smul.addr %s309, 32
        %s311 = scalar_lea.vmem [#allocation9], %s310
        // Predicated region
        $region41: #{tpu_custom_call.1} parent=31 // pred_check
          %p312 = pneg %p140
        $region42: #{tpu_custom_call.1} parent=31 // pred_check_branch
          %314 = sbr.rel (%p312) target = $region44
        $region43: #{tpu_custom_call.1} parent=31 // pred_region
          %315 = dma.done %s308, 512
        $region44: #{tpu_custom_call.1} parent=31 // pred_fallthru
          _
        %s316 = sand.u32 %s26, 1
        %s317 = scalar_lea.sflag [#allocation5], %s316
        %s318 = sand.u32 %s61, 1
        %s319 = smul.addr %s318, 32
        %s320 = scalar_lea.vmem [#allocation4], %s319
        %p321 = pneg %p74
        %p322 = pneg %p71
        %p323 = pneg %p106
        %p324 = pneg %p103
        %s325 = sand.u32 %s26, 1
        %s326 = scalar_lea.sflag [#allocation5], %s325
        %s327 = sand.u32 %s127, 1
        %s328 = smul.addr %s327, 32
        %s329 = scalar_lea.vmem [#allocation9], %s328
        %p330 = pneg %p140
        %p331 = pneg %p137
        %p332 = pneg %p168
        %p333 = pneg %p165
        %s334 = sand.u32 %s155, 1
        %s335 = scalar_lea.sflag [#allocation6], %s334
        %s336 = sand.u32 %s155, 1
        %s337 = scalar_lea.vmem [#allocation10], %s336
        %p338 = pneg %p196
        %p339 = pneg %p193
        %s340 = sand.u32 %s183, 1
        %s341 = scalar_lea.sflag [#allocation12], %s340
        %s342 = sand.u32 %s183, 1
        %s343 = scalar_lea.vmem [#allocation11], %s342
        %s344 = sadd.s32 %s31, %s32
        %p345 = scmp.lt.s32.totalorder %s344, 0
        %s346 = scalar_select %p345, %s344, 0
        %s347 = smul.u32 2, %s346
        %s348 = sadd.s32 %s31, %s32
        %p349 = scmp.lt.s32.totalorder %s348, 0
        %s350 = scalar_select %p349, %s348, 0
        %s351 = smul.u32 2, %s350
        %s352 = sadd.s32 %s31, %s32
        %p353 = scmp.lt.s32.totalorder %s352, 0
        %s354 = scalar_select %p353, %s352, 0
        %s355 = smul.u32 2, %s354
        %v356 = vld [vmem:[%s298] sm:$0xff]
        %v357 = vld [vmem:[%s298 + $0x8] sm:$0xff]
        %v358 = vld [vmem:[%s311] sm:$0xff]
        %v359 = vld [vmem:[%s311 + $0x8] sm:$0xff]
        %v360 = vld [vmem:[#allocation7] sm:$0xff]
        %v361 = vld [vmem:[#allocation7 + $0x8] sm:$0xff]
        %v362 = vsub.f32 %v358, %v356
        %v363 = vsub.f32 %v359, %v357
        %v364 = vsub.f32 %v360, %v358
        %v365 = vsub.f32 %v361, %v359
        %v366 = vmul.f32 %v362, %v362
        %v367 = vmul.f32 %v363, %v363
        %v368 = vmul.f32 %v364, %v364
        %v369 = vmul.f32 %v365, %v365
        %s370 = scalar_lea.vmem %s298, 16 [#allocation4]
        %v371 = vld [vmem:[%s370] sm:$0xff]
        %v372 = vld [vmem:[%s370 + $0x8] sm:$0xff]
        %s373 = scalar_lea.vmem %s311, 16 [#allocation9]
        %v374 = vld [vmem:[%s373] sm:$0xff]
        %v375 = vld [vmem:[%s373 + $0x8] sm:$0xff]
        %s376 = scalar_lea.vmem [#allocation7], 16
        %v377 = vld [vmem:[%s376] sm:$0xff]
        %v378 = vld [vmem:[%s376 + $0x8] sm:$0xff]
        %v379 = vsub.f32 %v374, %v371
        %v380 = vsub.f32 %v375, %v372
        %v381 = vsub.f32 %v377, %v374
        %v382 = vsub.f32 %v378, %v375
        %v383 = vmul.f32 %v379, %v379
        %v384 = vmul.f32 %v380, %v380
        %v385 = vadd.f32 %v366, %v383
        %v386 = vadd.f32 %v367, %v384
        %v387 = vmul.f32 %v381, %v381
        %v388 = vmul.f32 %v382, %v382
        %v389 = vadd.f32 %v368, %v387
        %v390 = vadd.f32 %v369, %v388
        %v391 = vrsqrt.pop %v389
        %v392 = vmul.f32 %v389, %v391
        %vm393 = vcmp.eq.f32.partialorder %v389, inf
        %v394 = vsel %vm393, %v389, %v392
        %vm395 = vcmp.eq.f32.partialorder %v389, 0.0
        %v396 = vand.u32 %v389, 2147483648
        %v397 = vsel %vm395, %v396, %v394
        %v398 = vrsqrt.pop %v390
        %v399 = vmul.f32 %v390, %v398
        %vm400 = vcmp.eq.f32.partialorder %v390, inf
        %v401 = vsel %vm400, %v390, %v399
        %vm402 = vcmp.eq.f32.partialorder %v390, 0.0
        %v403 = vand.u32 %v390, 2147483648
        %v404 = vsel %vm402, %v403, %v401
        %vm405 = vcmask 130048
        %v406 = vsel %vm405, %v397, 0.0
        %v407 = vsel %vm405, %v404, 0.0
        %v408 = vadd.f32 %v406, %v407
        %v409 = vrot.slane %v408, 4
        %v410 = vadd.f32 %v408, %v409
        %v411 = vrot.slane %v410, 2
        %v412 = vadd.f32 %v410, %v411
        %v413 = vrot.slane %v412, 1
        %v414 = vadd.f32 %v412, %v413
        %v415 = vrsqrt.pop %v385
        %v416 = vmul.f32 %v385, %v415
        %vm417 = vcmp.eq.f32.partialorder %v385, inf
        %v418 = vsel %vm417, %v385, %v416
        %vm419 = vcmp.eq.f32.partialorder %v385, 0.0
        %v420 = vand.u32 %v385, 2147483648
        %v421 = vsel %vm419, %v420, %v418
        %v422 = vrsqrt.pop %v386
        %v423 = vmul.f32 %v386, %v422
        %vm424 = vcmp.eq.f32.partialorder %v386, inf
        %v425 = vsel %vm424, %v386, %v423
        %vm426 = vcmp.eq.f32.partialorder %v386, 0.0
        %v427 = vand.u32 %v386, 2147483648
        %v428 = vsel %vm426, %v427, %v425
        %v429 = vsel %vm405, %v421, 0.0
        %v430 = vsel %vm405, %v428, 0.0
        %v431 = vadd.f32 %v429, %v430
        %v432 = vrot.slane %v431, 4
        %v433 = vadd.f32 %v431, %v432
        %v434 = vrot.slane %v433, 2
        %v435 = vadd.f32 %v433, %v434
        %v436 = vrot.slane %v435, 1
        %v437 = vadd.f32 %v435, %v436
        %p438 = scmp.eq.s32.totalorder %s32, 0
        // Predicated region
        $region45: #{tpu_custom_call.1} parent=31 // pred_check
          %p439 = pneg %p438
        $region46: #{tpu_custom_call.1} parent=31 // pred_check_branch
          %441 = sbr.rel (%p439) target = $region48
        $region47: #{tpu_custom_call.1} parent=31 // pred_region
          %s442 = scalar_lea.vmem [#allocation2], %s33
          %vm443 = vcmask 122880
          %444 = vst.msk [vmem:[%s442] sm:$0x1] %vm443, 0.0
          %s445 = scalar_lea.vmem [#allocation3], %s33
          %446 = vst.msk [vmem:[%s445] sm:$0x1] %vm443, 0.0
        $region48: #{tpu_custom_call.1} parent=31 // pred_fallthru
          _
        %s447 = scalar_lea.vmem [#allocation2], %s33
        %v448 = vld [vmem:[%s447] sm:$0x1]
        %v449 = vadd.f32 %v448, %v414
        %vm450 = vcmask 122880
        %451 = vst.msk [vmem:[%s447] sm:$0x1] %vm450, %v449
        %s452 = scalar_lea.vmem [#allocation3], %s33
        %v453 = vld [vmem:[%s452] sm:$0x1]
        %v454 = vadd.f32 %v453, %v437
        %455 = vst.msk [vmem:[%s452] sm:$0x1] %vm450, %v454
        %v456 = vld [vmem:[%s447] sm:$0x1]
        %457 = vst.msk [vmem:[%s337] sm:$0x1] %vm450, %v456
        %v458 = vld [vmem:[%s452] sm:$0x1]
        %459 = vst.msk [vmem:[%s343] sm:$0x1] %vm450, %v458
        %s460 = sand.u32 %s155, 1
        %s461 = scalar_lea.sflag [#allocation6], %s460
        %s462 = sand.u32 %s155, 1
        %s463 = scalar_lea.vmem [#allocation10], %s462
        %s464 = sand.u32 %s183, 1
        %s465 = scalar_lea.sflag [#allocation12], %s464
        %s466 = sand.u32 %s183, 1
        %s467 = scalar_lea.vmem [#allocation11], %s466
        // Predicated region
        $region49: #{tpu_custom_call.1} parent=31 // pred_check
          %p468 = pneg %p165
        $region50: #{tpu_custom_call.1} parent=31 // pred_check_branch
          %470 = sbr.rel (%p468) target = $region52
        $region51: #{tpu_custom_call.1} parent=31 // pred_region
          %s472 = ssub.s32 16, 16
          %473 = vsyncadd %s461, %s472
          %s474 = smul.addr %s31, 2
          %s475 = sadd.s32 %s33, %s474
          %s476 = smul.addr %s475, 16
          %s477 = scalar_lea.hbm %s3, %s476
          %s479 = sshll.u32 %s463, 4
          %s480 = int_to_ptr.vmem [resolvable:$true] %s479
          %482 = dma.vmem_to_hbm [thread:$0]  %s480, 16, %s477, %s461
        $region52: #{tpu_custom_call.1} parent=31 // pred_fallthru
          _
        // Predicated region
        $region53: #{tpu_custom_call.1} parent=31 // pred_check
          %p483 = pneg %p193
        $region54: #{tpu_custom_call.1} parent=31 // pred_check_branch
          %485 = sbr.rel (%p483) target = $region56
        $region55: #{tpu_custom_call.1} parent=31 // pred_region
          %s487 = ssub.s32 16, 16
          %488 = vsyncadd %s465, %s487
          %s489 = smul.addr %s31, 2
          %s490 = sadd.s32 %s33, %s489
          %s491 = smul.addr %s490, 16
          %s492 = scalar_lea.hbm %s4, %s491
          %s494 = sshll.u32 %s467, 4
          %s495 = int_to_ptr.vmem [resolvable:$true] %s494
          %497 = dma.vmem_to_hbm [thread:$0]  %s495, 16, %s492, %s465
        $region56: #{tpu_custom_call.1} parent=31 // pred_fallthru
          _
      $region32: #{tpu_custom_call.1} parent=5 // pred_fallthru
        _
      %p498 = scmp.le.s32.totalorder 2, %s21
      // Predicated region
      $region57: #{tpu_custom_call.1} parent=5 // pred_check
        %p499 = pneg %p498
      $region58: #{tpu_custom_call.1} parent=5 // pred_check_branch
        %501 = sbr.rel (%p499) target = $region60
      $region59: #{tpu_custom_call.1} parent=5 // pred_region
        %s502 = ssub.s32 %s21, 2
        // Predicated region
        $region61: #{tpu_custom_call.1} parent=59 // pred_check
          %p503 = pneg %p171
        $region62: #{tpu_custom_call.1} parent=59 // pred_check_branch
          %505 = sbr.rel (%p503) target = $region64
        $region63: #{tpu_custom_call.1} parent=59 // pred_region
          %s506 = sand.u32 %s156, 1
          %s507 = scalar_lea.sflag [#allocation6], %s506
          %s508 = sand.u32 %s156, 1
          %s509 = scalar_lea.vmem [#allocation10], %s508
          %510 = dma.done %s507, 16
        $region64: #{tpu_custom_call.1} parent=59 // pred_fallthru
          _
        // Predicated region
        $region65: #{tpu_custom_call.1} parent=59 // pred_check
          %p511 = pneg %p199
        $region66: #{tpu_custom_call.1} parent=59 // pred_check_branch
          %513 = sbr.rel (%p511) target = $region68
        $region67: #{tpu_custom_call.1} parent=59 // pred_region
          %s514 = sand.u32 %s184, 1
          %s515 = scalar_lea.sflag [#allocation12], %s514
          %s516 = sand.u32 %s184, 1
          %s517 = scalar_lea.vmem [#allocation11], %s516
          %518 = dma.done %s515, 16
        $region68: #{tpu_custom_call.1} parent=59 // pred_fallthru
          _
      $region60: #{tpu_custom_call.1} parent=5 // pred_fallthru
        _
    $region6: #{tpu_custom_call.1} parent=1 // loop_footer
      %s25 = sadd.s32 1, %s21
    $region7: #{tpu_custom_call.1} parent=1 // loop_footer_branch
      %20 = sbr.rel target = $region3
    $region8: #{tpu_custom_call.1} parent=1 // loop_exit
      _
    %519 = vsyncpa [#allocation5], 1
    %s520 = scalar_lea.sflag [#allocation5], 1
    %521 = vsyncpa %s520, 1
    %522 = vsyncpa [#allocation8], 1
    %523 = vsyncpa [#allocation6], 1
    %s524 = scalar_lea.sflag [#allocation6], 1
    %525 = vsyncpa %s524, 1
    %526 = vsyncpa [#allocation12], 1
    %s527 = scalar_lea.sflag [#allocation12], 1
    %528 = vsyncpa %s527, 1

</llo_original>
